<compile_context>
chip_gen: v7x
topology: tpu7x:2x2x1
jax: 0.10.0
libtpu: 0.0.40
codegen_flags: <defaults>
</compile_context>

<pallas_src>
import jax
import jax.numpy as jnp
from jax.experimental import pallas as pl
from jax.experimental.pallas import tpu as pltpu


def _make_se_kernel(b_blk, C, Cr):
    """Kernel over one (b_blk*C, HW) tile: rows = packed (batch, channel), lanes = spatial."""
    rows = b_blk * C
    del rows  # structure documented above; shapes are carried by the refs

    def kernel(x_ref, g_ref, gt_ref, w1r_ref, b1_ref, w2r_ref, b2r_ref, o_ref):
        # ---- squeeze: per-(batch, channel) spatial mean -------------------------------
        # Cast fuses into the cross-lane reduce; no f32 copy of the tile is materialized.
        pooled_rows = jnp.mean(x_ref[...].astype(jnp.float32), axis=1, keepdims=True)  # (rows, 1)

        # ---- excitation: fc1 -> ReLU -> fc2 -> sigmoid ---------------------------------
        # Row-tiled params from the wrapper: w1r[r, j] = w1[r % C, j],
        # w2r[r, j] = w2[j, r % C], b2r[r, 0] = b2[r % C].
        w1r = w1r_ref[...]                                    # (rows, Cr) f32
        b1 = b1_ref[...]                                      # (1, Cr)    f32
        contrib = pooled_rows * w1r                           # (rows, Cr)

        if b_blk == 1:
            # Single batch per tile: the grouped sum is a plain sublane reduce.
            h = jnp.maximum(jnp.sum(contrib, axis=0, keepdims=True) + b1, 0.0)       # (1, Cr)
            h_rows = h                                        # broadcasts over rows below
        else:
            # g[b, r] = 1 iff row r belongs to batch b (0/1 selector, built in wrapper).
            # The MXU dots do the per-batch reduce / broadcast; no in-kernel reshape.
            g = g_ref[...]                                    # (b_blk, rows) f32
            gt = gt_ref[...]                                  # (rows, b_blk) f32
            h = jnp.maximum(
                jnp.dot(g, contrib, preferred_element_type=jnp.float32) + b1, 0.0)   # (b_blk, Cr)
            h_rows = jnp.dot(gt, h, preferred_element_type=jnp.float32)              # (rows, Cr)

        z_rows = jnp.sum(h_rows * w2r_ref[...], axis=1, keepdims=True) + b2r_ref[...]  # (rows, 1)
        scale_rows = jax.nn.sigmoid(z_rows)                   # (rows, 1)

        # ---- scale: per-row gate broadcast over the lane (spatial) axis -----------------
        o_ref[...] = (x_ref[...] * scale_rows.astype(x_ref.dtype)).astype(o_ref.dtype)

    return kernel


def _choose_b_blk(B, C, HW, itemsize, num_cores=1,
                  target_bytes=4 << 20, min_core_tile_bytes=1 << 20):
    """Largest batch-divisor block whose (b*C, HW) tile fits `target_bytes`, subject to the
    sublane constraint (b*C a multiple of 8, or the full extent).  On multi-core chips keep
    the grid a multiple of the core count while tiles stay >= ~1 MiB."""
    legal = [d for d in range(1, B + 1)
             if B % d == 0 and ((d * C) % 8 == 0 or d == B)]
    fitting = [d for d in legal if d * C * HW * itemsize <= target_bytes]
    if not fitting:
        # Even the smallest legal tile exceeds the target; take it and rely on
        # vmem_limit_bytes (see TODO at top for the HW-chunked fallback).
        return min(legal)
    b_blk = max(fitting)
    if num_cores > 1:
        balanced = [d for d in fitting
                    if (B // d) % num_cores == 0
                    and d * C * HW * itemsize >= min_core_tile_bytes]
        if balanced:
            b_blk = max(balanced)
    return b_blk


def squeeze_excitation(x, w1, b1, w2, b2):
    """x: (B, C, H, W).  w1: (C, Cr) (= fc1.weight.T), b1: (Cr,),
    w2: (Cr, C) (= fc2.weight.T), b2: (C,).  Returns x * SE_gate(x)."""
    B, C, H, W = x.shape
    Cr = w1.shape[1]
    HW = H * W

    # Sublane/lane-dense view: (batch*channel) rows x spatial lanes.
    x2 = x.reshape(B * C, HW)

    num_cores = getattr(jax.devices()[0], "num_cores", 1) or 1
    b_blk = _choose_b_blk(B, C, HW, x.dtype.itemsize, num_cores=num_cores)
    rows_blk = b_blk * C
    grid = (B // b_blk,)

    f32 = jnp.float32
    # Constant regroup / row-tiled parameter tensors (tiny, built once in pure XLA).
    g = jnp.repeat(jnp.eye(b_blk, dtype=f32), C, axis=1)            # (b_blk, rows_blk)
    gt = g.T                                                        # (rows_blk, b_blk)
    w1_row = jnp.tile(w1.astype(f32), (b_blk, 1))                   # (rows_blk, Cr)
    b1_row = b1.astype(f32).reshape(1, Cr)                          # (1, Cr)
    w2_row = jnp.tile(w2.astype(f32).T, (b_blk, 1))                 # (rows_blk, Cr)
    b2_row = jnp.tile(b2.astype(f32), b_blk).reshape(rows_blk, 1)   # (rows_blk, 1)

    tile_bytes = rows_blk * HW * x.dtype.itemsize
    const_bytes = 4 * (g.size + gt.size + w1_row.size + b1_row.size
                       + w2_row.size + b2_row.size)
    # 2x double-buffered input + 2x output tiles + resident constants + headroom.
    vmem_bytes = int(min(max(4 * tile_bytes + 2 * const_bytes + (2 << 20), 8 << 20),
                         48 << 20))

    out2 = pl.pallas_call(
        _make_se_kernel(b_blk, C, Cr),
        out_shape=jax.ShapeDtypeStruct((B * C, HW), x.dtype),
        grid_spec=pltpu.PrefetchScalarGridSpec(
            num_scalar_prefetch=0,
            grid=grid,
            in_specs=[
                pl.BlockSpec((rows_blk, HW), lambda b: (b, 0)),
                pl.BlockSpec((b_blk, rows_blk), lambda b: (0, 0)),   # constants stay resident
                pl.BlockSpec((rows_blk, b_blk), lambda b: (0, 0)),
                pl.BlockSpec((rows_blk, Cr), lambda b: (0, 0)),
                pl.BlockSpec((1, Cr), lambda b: (0, 0)),
                pl.BlockSpec((rows_blk, Cr), lambda b: (0, 0)),
                pl.BlockSpec((rows_blk, 1), lambda b: (0, 0)),
            ],
            out_specs=pl.BlockSpec((rows_blk, HW), lambda b: (b, 0)),
        ),
        compiler_params=pltpu.CompilerParams(
            dimension_semantics=("parallel",),
            vmem_limit_bytes=vmem_bytes,
        ),
    )(x2, g, gt, w1_row, b1_row, w2_row, b2_row)

    return out2.reshape(B, C, H, W)


if __name__ == "__main__":
    key = jax.random.PRNGKey(0)
    # Shapes implied by the module: batch=2, channels(inplanes)=4, spatial=16x16,
    # reduction_ratio=4 -> bottleneck Cr = max(4 // 4, 1) = 1.
    B, C, H, W = 2, 4, 16, 16
    reduction_ratio = 4
    Cr = max(C // reduction_ratio, 1)

    k1, k2, k3, k4, k5 = jax.random.split(key, 5)
    x = jax.random.normal(k1, (B, C, H, W), dtype=jnp.float32)
    # Stored pre-transposed relative to torch.nn.Linear: w1 == fc1.weight.T, w2 == fc2.weight.T.
    w1 = jax.random.normal(k2, (C, Cr), dtype=jnp.float32) * 0.5
    b1 = jax.random.normal(k3, (Cr,), dtype=jnp.float32) * 0.1
    w2 = jax.random.normal(k4, (Cr, C), dtype=jnp.float32) * 0.5
    b2 = jax.random.normal(k5, (C,), dtype=jnp.float32) * 0.1

    out = jax.block_until_ready(squeeze_excitation(x, w1, b1, w2, b2))

    # Pure-JAX reference with identical semantics to the PyTorch forward.
    pooled = jnp.mean(x, axis=(2, 3))                       # AdaptiveAvgPool2d((1,1)) + squeeze
    h = jnp.maximum(pooled @ w1 + b1, 0.0)                  # fc1 + ReLU
    z = h @ w2 + b2                                         # fc2
    s = 1.0 / (1.0 + jnp.exp(-z))                           # Sigmoid
    ref = x * s[:, :, None, None]

    assert out.shape == x.shape
    assert jnp.allclose(out, ref, atol=1e-5, rtol=1e-5)

    print("KERNEL_OK")
</pallas_src>

<mosaic_0001>
module attributes {stable_mosaic.version = 11 : i64} {
  func.func @kernel(%arg0: i32, %arg1: memref<8x256xf32, #tpu.memory_space<vmem>>, %arg2: memref<2x8xf32, #tpu.memory_space<vmem>>, %arg3: memref<8x2xf32, #tpu.memory_space<vmem>>, %arg4: memref<8x1xf32, #tpu.memory_space<vmem>>, %arg5: memref<1x1xf32, #tpu.memory_space<vmem>>, %arg6: memref<8x1xf32, #tpu.memory_space<vmem>>, %arg7: memref<8x1xf32, #tpu.memory_space<vmem>>, %arg8: memref<8x256xf32, #tpu.memory_space<vmem>>) attributes {dimension_semantics = [#tpu.dimension_semantics<parallel>], iteration_bounds = array<i64: 1>, scalar_prefetch = 0 : i64, scratch_operands = 0 : i64, tpu.core_type = #tpu.core_type<tc>, window_params = [{transform_indices = @transform_0, window_bounds = array<i64: 8, 256>}, {pipeline_mode = #tpu.pipeline_mode<synchronous>, transform_indices = @transform_1, window_bounds = array<i64: 2, 8>}, {pipeline_mode = #tpu.pipeline_mode<synchronous>, transform_indices = @transform_2, window_bounds = array<i64: 8, 2>}, {pipeline_mode = #tpu.pipeline_mode<synchronous>, transform_indices = @transform_3, window_bounds = array<i64: 8, 1>}, {pipeline_mode = #tpu.pipeline_mode<synchronous>, transform_indices = @transform_4, window_bounds = array<i64: 1, 1>}, {pipeline_mode = #tpu.pipeline_mode<synchronous>, transform_indices = @transform_5, window_bounds = array<i64: 8, 1>}, {pipeline_mode = #tpu.pipeline_mode<synchronous>, transform_indices = @transform_6, window_bounds = array<i64: 8, 1>}, {transform_indices = @transform_7, window_bounds = array<i64: 8, 256>}]} {
    %c0 = arith.constant 0 : index
    %c0_0 = arith.constant 0 : index
    %0 = vector.load %arg1[%c0, %c0_0] : memref<8x256xf32, #tpu.memory_space<vmem>>, vector<8x256xf32>
    %cst = arith.constant dense<0.000000e+00> : vector<8xf32>
    %1 = vector.multi_reduction <add>, %0, %cst [1] : vector<8x256xf32> to vector<8xf32>
    %2 = vector.shape_cast %1 : vector<8xf32> to vector<8x1xf32>
    %cst_1 = arith.constant 2.560000e+02 : f32
    %3 = vector.broadcast %cst_1 : f32 to vector<8x1xf32>
    %4 = arith.divf %2, %3 : vector<8x1xf32>
    %c0_2 = arith.constant 0 : index
    %c0_3 = arith.constant 0 : index
    %5 = vector.load %arg4[%c0_2, %c0_3] : memref<8x1xf32, #tpu.memory_space<vmem>>, vector<8x1xf32>
    %c0_4 = arith.constant 0 : index
    %c0_5 = arith.constant 0 : index
    %6 = vector.load %arg5[%c0_4, %c0_5] : memref<1x1xf32, #tpu.memory_space<vmem>>, vector<1x1xf32>
    %7 = arith.mulf %4, %5 : vector<8x1xf32>
    %c0_6 = arith.constant 0 : index
    %c0_7 = arith.constant 0 : index
    %8 = vector.load %arg2[%c0_6, %c0_7] : memref<2x8xf32, #tpu.memory_space<vmem>>, vector<2x8xf32>
    %c0_8 = arith.constant 0 : index
    %c0_9 = arith.constant 0 : index
    %9 = vector.load %arg3[%c0_8, %c0_9] : memref<8x2xf32, #tpu.memory_space<vmem>>, vector<8x2xf32>
    %cst_10 = arith.constant dense<0.000000e+00> : vector<2x1xf32>
    %10 = tpu.matmul %8, %7, %cst_10 {dimension_numbers = #tpu.dot_dimension_numbers<[1], [0], [0], [1], [0, 0, 1, 1], [], []>} : vector<2x8xf32>, vector<8x1xf32>, vector<2x1xf32> -> vector<2x1xf32>
    %11 = vector.broadcast %6 : vector<1x1xf32> to vector<2x1xf32>
    %12 = arith.addf %10, %11 : vector<2x1xf32>
    %cst_11 = arith.constant 0.000000e+00 : f32
    %13 = vector.broadcast %cst_11 : f32 to vector<2x1xf32>
    %14 = arith.maximumf %12, %13 : vector<2x1xf32>
    %cst_12 = arith.constant dense<0.000000e+00> : vector<8x1xf32>
    %15 = tpu.matmul %9, %14, %cst_12 {dimension_numbers = #tpu.dot_dimension_numbers<[1], [0], [0], [1], [0, 0, 1, 1], [], []>} : vector<8x2xf32>, vector<2x1xf32>, vector<8x1xf32> -> vector<8x1xf32>
    %c0_13 = arith.constant 0 : index
    %c0_14 = arith.constant 0 : index
    %16 = vector.load %arg6[%c0_13, %c0_14] : memref<8x1xf32, #tpu.memory_space<vmem>>, vector<8x1xf32>
    %17 = arith.mulf %15, %16 : vector<8x1xf32>
    %cst_15 = arith.constant dense<0.000000e+00> : vector<8xf32>
    %18 = vector.multi_reduction <add>, %17, %cst_15 [1] : vector<8x1xf32> to vector<8xf32>
    %19 = vector.shape_cast %18 : vector<8xf32> to vector<8x1xf32>
    %c0_16 = arith.constant 0 : index
    %c0_17 = arith.constant 0 : index
    %20 = vector.load %arg7[%c0_16, %c0_17] : memref<8x1xf32, #tpu.memory_space<vmem>>, vector<8x1xf32>
    %21 = arith.addf %19, %20 : vector<8x1xf32>
    %22 = arith.negf %21 : vector<8x1xf32>
    %23 = math.exp %22 : vector<8x1xf32>
    %cst_18 = arith.constant 1.000000e+00 : f32
    %24 = vector.broadcast %cst_18 : f32 to vector<8x1xf32>
    %25 = arith.addf %24, %23 : vector<8x1xf32>
    %26 = arith.divf %24, %25 : vector<8x1xf32>
    %c0_19 = arith.constant 0 : index
    %c0_20 = arith.constant 0 : index
    %27 = vector.load %arg1[%c0_19, %c0_20] : memref<8x256xf32, #tpu.memory_space<vmem>>, vector<8x256xf32>
    %28 = vector.broadcast %26 : vector<8x1xf32> to vector<8x256xf32>
    %29 = arith.mulf %27, %28 : vector<8x256xf32>
    %c0_21 = arith.constant 0 : index
    %c0_22 = arith.constant 0 : index
    %30 = vector.load %arg8[%c0_21, %c0_22] : memref<8x256xf32, #tpu.memory_space<vmem>>, vector<8x256xf32>
    tpu.vector_store %arg8[%c0_21, %c0_22], %29 {strides = array<i32>} : memref<8x256xf32, #tpu.memory_space<vmem>>, vector<8x256xf32>,
    return
  }
  func.func @transform_0(%arg0: i32) -> (i32, i32) {
    %c0_i32 = arith.constant 0 : i32
    %c0_i32_0 = arith.constant 0 : i32
    return %arg0, %c0_i32 : i32, i32
  }
  func.func @transform_1(%arg0: i32) -> (i32, i32) {
    %c0_i32 = arith.constant 0 : i32
    %c0_i32_0 = arith.constant 0 : i32
    %c0_i32_1 = arith.constant 0 : i32
    return %c0_i32, %c0_i32_0 : i32, i32
  }
  func.func @transform_2(%arg0: i32) -> (i32, i32) {
    %c0_i32 = arith.constant 0 : i32
    %c0_i32_0 = arith.constant 0 : i32
    %c0_i32_1 = arith.constant 0 : i32
    return %c0_i32, %c0_i32_0 : i32, i32
  }
  func.func @transform_3(%arg0: i32) -> (i32, i32) {
    %c0_i32 = arith.constant 0 : i32
    %c0_i32_0 = arith.constant 0 : i32
    %c0_i32_1 = arith.constant 0 : i32
    return %c0_i32, %c0_i32_0 : i32, i32
  }
  func.func @transform_4(%arg0: i32) -> (i32, i32) {
    %c0_i32 = arith.constant 0 : i32
    %c0_i32_0 = arith.constant 0 : i32
    %c0_i32_1 = arith.constant 0 : i32
    return %c0_i32, %c0_i32_0 : i32, i32
  }
  func.func @transform_5(%arg0: i32) -> (i32, i32) {
    %c0_i32 = arith.constant 0 : i32
    %c0_i32_0 = arith.constant 0 : i32
    %c0_i32_1 = arith.constant 0 : i32
    return %c0_i32, %c0_i32_0 : i32, i32
  }
  func.func @transform_6(%arg0: i32) -> (i32, i32) {
    %c0_i32 = arith.constant 0 : i32
    %c0_i32_0 = arith.constant 0 : i32
    %c0_i32_1 = arith.constant 0 : i32
    return %c0_i32, %c0_i32_0 : i32, i32
  }
  func.func @transform_7(%arg0: i32) -> (i32, i32) {
    %c0_i32 = arith.constant 0 : i32
    %c0_i32_0 = arith.constant 0 : i32
    return %arg0, %c0_i32 : i32, i32
  }
}

</mosaic_0001>

<llo_original>
// kernel: tpu_custom_call.1
$region0: #{tpu_custom_call.1}
  #allocation0 [shape = 'u32[]', space=smem, size = 0x4, offset = 0x4, fixed_abs, tag = 'smem constant byte address 0x4 - core index']
  #allocation1 [shape = 'u32[144,128]{1,0:T(1,128)}', space=vmem, size = 0x12000, scoped, tag = 'internal scratch']
  #allocation2 [shape = 'f32[1,1]{1,0:T(1,128)S(1)}', space=vmem, size = 0x200, scoped, tag = 'scoped memory for tpu_custom_call.1']
  %s0 = inlined_call_operand.vmem [shape: f32[8,256], index: 0, kind: input, shape index: {}]
  %s1 = inlined_call_operand.vmem [shape: f32[2,8], index: 1, kind: input, shape index: {}]
  %s2 = inlined_call_operand.vmem [shape: f32[8,2], index: 2, kind: input, shape index: {}]
  %s3 = inlined_call_operand.vmem [shape: f32[8,1], index: 3, kind: input, shape index: {}]
  %s4 = inlined_call_operand.<no memory space> [shape: f32[1,1], index: 4, kind: input, shape index: {}]
  %s5 = inlined_call_operand.vmem [shape: f32[8,1], index: 5, kind: input, shape index: {}]
  %s6 = inlined_call_operand.vmem [shape: f32[8,1], index: 6, kind: input, shape index: {}]
  %s7 = inlined_call_operand.hbm [shape: f32[8,256], index: 7, kind: output, shape index: {}]
  %s8 = sld [smem:[#allocation0]]
  $region38: #{tpu_custom_call.1} parent=0
    _
  %s10 = ssub.s32 1, %s8
  %s11 = scalar_select 0, %s10, %s8
  %v12 = vstv %s4
  %13 = vst [vmem:[#allocation2] sm:$0x1] %v12
  $region1: #{tpu_custom_call.1} parent=0
    #allocation3 [shape = 'u8[8192]{0}', space=vmem, size = 0x2000, scoped, tag = 'output window, operand 0, single buffered']
    #allocation4 [shape = 's32[1]{0}', space=sflag, size = 0x4, scoped, tag = 'scoped memory for tpu_custom_call.1']
    %14 = vsyncpa [#allocation4], 0
    // Predicated region
    $region2: #{tpu_custom_call.1} parent=1 // pred_check
      _
    $region3: #{tpu_custom_call.1} parent=1 // pred_check_branch
      %16 = sbr.rel (0) target = $region5
    $region4: #{tpu_custom_call.1} parent=1 // pred_region
      _
    $region5: #{tpu_custom_call.1} parent=1 // pred_fallthru
      _
    // Predicated region
    $region6: #{tpu_custom_call.1} parent=1 // pred_check
      _
    $region7: #{tpu_custom_call.1} parent=1 // pred_check_branch
      %18 = sbr.rel (0) target = $region9
    $region8: #{tpu_custom_call.1} parent=1 // pred_region
      _
    $region9: #{tpu_custom_call.1} parent=1 // pred_fallthru
      _
    // Predicated region
    $region10: #{tpu_custom_call.1} parent=1 // pred_check
      _
    $region11: #{tpu_custom_call.1} parent=1 // pred_check_branch
      %20 = sbr.rel (0) target = $region13
    $region12: #{tpu_custom_call.1} parent=1 // pred_region
      _
    $region13: #{tpu_custom_call.1} parent=1 // pred_fallthru
      _
    // Predicated region
    $region14: #{tpu_custom_call.1} parent=1 // pred_check
      _
    $region15: #{tpu_custom_call.1} parent=1 // pred_check_branch
      %22 = sbr.rel (0) target = $region17
    $region16: #{tpu_custom_call.1} parent=1 // pred_region
      _
    $region17: #{tpu_custom_call.1} parent=1 // pred_fallthru
      _
    // Predicated region
    $region18: #{tpu_custom_call.1} parent=1 // pred_check
      _
    $region19: #{tpu_custom_call.1} parent=1 // pred_check_branch
      %24 = sbr.rel (0) target = $region21
    $region20: #{tpu_custom_call.1} parent=1 // pred_region
      _
    $region21: #{tpu_custom_call.1} parent=1 // pred_fallthru
      _
    // Predicated region
    $region22: #{tpu_custom_call.1} parent=1 // pred_check
      _
    $region23: #{tpu_custom_call.1} parent=1 // pred_check_branch
      %26 = sbr.rel (0) target = $region25
    $region24: #{tpu_custom_call.1} parent=1 // pred_region
      _
    $region25: #{tpu_custom_call.1} parent=1 // pred_fallthru
      _
    // Predicated region
    $region26: #{tpu_custom_call.1} parent=1 // pred_check
      _
    $region27: #{tpu_custom_call.1} parent=1 // pred_check_branch
      %28 = sbr.rel (0) target = $region29
    $region28: #{tpu_custom_call.1} parent=1 // pred_region
      _
    $region29: #{tpu_custom_call.1} parent=1 // pred_fallthru
      _
    %v29 = vld [vmem:[%s0] sm:$0xff]
    %v30 = vld [vmem:[%s0 + $0x8] sm:$0xff]
    %v31 = vadd.f32 %v29, %v30
    %32 = vadd.xlane.f32.xlu0 %v31
    %v33 = vpop.xlane.xlu0 %32
    %v34 = vrcp.pop 256.0
    %v35 = vmul.f32 %v33, %v34
    %v36 = vld [vmem:[%s3] sm:$0xff]
    %v37 = vld [vmem:[#allocation2] sm:$0x1]
    %v38 = vmul.f32 %v35, %v36
    %v39 = vld [vmem:[%s1] sm:$0x3]
    %v40 = vld [vmem:[%s2] sm:$0xff]
    %v42 = vlaneseq
    %v43 = vshrl.u32 %v42, 7
    %v44 = vsub.s32 0, %v43
    %v45 = vrot.slane %v37, %v44
    %vm47 = vcmask 64512
    %v49 = vsel %vm47, %v39, 0
    %51 = vmatprep.subr.mxu0 0.0
    %52 = vmatpush1.msra.mxu0 %v38
    %53 = vmatprep.subr.mxu0 0.0
    %54 = vmatpush1.msra.mxu0 0.0
    %55 = vmatprep.subr.mxu0 0.0
    %56 = vmatpush1.msra.mxu0 0.0
    %57 = vmatprep.subr.mxu0 0.0
    %58 = vmatpush1.msra.mxu0 0.0
    %59 = vmatprep.subr.mxu0 0.0
    %60 = vmatpush1.msra.mxu0 0.0
    %61 = vmatprep.subr.mxu0 0.0
    %62 = vmatpush1.msra.mxu0 0.0
    %63 = vmatprep.subr.mxu0 0.0
    %64 = vmatpush1.msra.mxu0 0.0
    %65 = vmatprep.subr.mxu0 0.0
    %66 = vmatpush1.msra.mxu0 0.0
    %67 = vmatprep.subr.mxu0 0.0
    %68 = vmatpush1.msra.mxu0 0.0
    %69 = vmatprep.subr.mxu0 0.0
    %70 = vmatpush1.msra.mxu0 0.0
    %71 = vmatprep.subr.mxu0 0.0
    %72 = vmatpush1.msra.mxu0 0.0
    %73 = vmatprep.subr.mxu0 0.0
    %74 = vmatpush1.msra.mxu0 0.0
    %75 = vmatprep.subr.mxu0 0.0
    %76 = vmatpush1.msra.mxu0 0.0
    %77 = vmatprep.subr.mxu0 0.0
    %78 = vmatpush1.msra.mxu0 0.0
    %79 = vmatprep.subr.mxu0 0.0
    %80 = vmatpush1.msra.mxu0 0.0
    %81 = vmatprep.subr.mxu0 0.0
    %82 = vmatpush1.msra.mxu0 0.0
    %83 = vmatprep.subr.mxu0 0.0
    %84 = vmatpush1.msra.mxu0 0.0
    %85 = vmatprep.subr.mxu0 0.0
    %86 = vmatpush1.msra.mxu0 0.0
    %87 = vmatprep.subr.mxu0 0.0
    %88 = vmatpush1.msra.mxu0 0.0
    %89 = vmatprep.subr.mxu0 0.0
    %90 = vmatpush1.msra.mxu0 0.0
    %91 = vmatprep.subr.mxu0 0.0
    %92 = vmatpush1.msra.mxu0 0.0
    %93 = vmatprep.subr.mxu0 0.0
    %94 = vmatpush1.msra.mxu0 0.0
    %95 = vmatprep.subr.mxu0 0.0
    %96 = vmatpush1.msra.mxu0 0.0
    %97 = vmatprep.subr.mxu0 0.0
    %98 = vmatpush1.msra.mxu0 0.0
    %99 = vmatprep.subr.mxu0 0.0
    %100 = vmatpush1.msra.mxu0 0.0
    %101 = vmatprep.subr.mxu0 0.0
    %102 = vmatpush1.msra.mxu0 0.0
    %103 = vmatprep.subr.mxu0 0.0
    %104 = vmatpush1.msra.mxu0 0.0
    %105 = vmatprep.subr.mxu0 0.0
    %106 = vmatpush1.msra.mxu0 0.0
    %107 = vmatprep.subr.mxu0 0.0
    %108 = vmatpush1.msra.mxu0 0.0
    %109 = vmatprep.subr.mxu0 0.0
    %110 = vmatpush1.msra.mxu0 0.0
    %111 = vmatprep.subr.mxu0 0.0
    %112 = vmatpush1.msra.mxu0 0.0
    %113 = vmatprep.subr.mxu0 0.0
    %114 = vmatpush1.msra.mxu0 0.0
    %115 = vmatprep.mubr.f32.mxu0 0.0
    %116 = vmatmul.mubr.f32.gmra.mrb[0].mxu0 %v49
    %v117 = vpop.f32.mrb[0].mxu0
    %v118 = vadd.f32 %v45, %v117
    %v119 = vpop.f32.mrb[0].mxu0
    %120 = vdwg.mxu0
    %v121 = vmax.f32 %v118, 0.0
    %vm122 = vcmask 15360
    %v124 = vsel %vm122, %v40, 0
    %vm126 = vcmask 1041408
    %v128 = vsel %vm126, %v121, 0
    %130 = vmatprep.subr.mxu0 0.0
    %131 = vmatpush1.msra.mxu0 %v128
    %132 = vmatprep.subr.mxu0 0.0
    %133 = vmatpush1.msra.mxu0 0.0
    %134 = vmatprep.subr.mxu0 0.0
    %135 = vmatpush1.msra.mxu0 0.0
    %136 = vmatprep.subr.mxu0 0.0
    %137 = vmatpush1.msra.mxu0 0.0
    %138 = vmatprep.subr.mxu0 0.0
    %139 = vmatpush1.msra.mxu0 0.0
    %140 = vmatprep.subr.mxu0 0.0
    %141 = vmatpush1.msra.mxu0 0.0
    %142 = vmatprep.subr.mxu0 0.0
    %143 = vmatpush1.msra.mxu0 0.0
    %144 = vmatprep.subr.mxu0 0.0
    %145 = vmatpush1.msra.mxu0 0.0
    %146 = vmatprep.subr.mxu0 0.0
    %147 = vmatpush1.msra.mxu0 0.0
    %148 = vmatprep.subr.mxu0 0.0
    %149 = vmatpush1.msra.mxu0 0.0
    %150 = vmatprep.subr.mxu0 0.0
    %151 = vmatpush1.msra.mxu0 0.0
    %152 = vmatprep.subr.mxu0 0.0
    %153 = vmatpush1.msra.mxu0 0.0
    %154 = vmatprep.subr.mxu0 0.0
    %155 = vmatpush1.msra.mxu0 0.0
    %156 = vmatprep.subr.mxu0 0.0
    %157 = vmatpush1.msra.mxu0 0.0
    %158 = vmatprep.subr.mxu0 0.0
    %159 = vmatpush1.msra.mxu0 0.0
    %160 = vmatprep.subr.mxu0 0.0
    %161 = vmatpush1.msra.mxu0 0.0
    %162 = vmatprep.subr.mxu0 0.0
    %163 = vmatpush1.msra.mxu0 0.0
    %164 = vmatprep.subr.mxu0 0.0
    %165 = vmatpush1.msra.mxu0 0.0
    %166 = vmatprep.subr.mxu0 0.0
    %167 = vmatpush1.msra.mxu0 0.0
    %168 = vmatprep.subr.mxu0 0.0
    %169 = vmatpush1.msra.mxu0 0.0
    %170 = vmatprep.subr.mxu0 0.0
    %171 = vmatpush1.msra.mxu0 0.0
    %172 = vmatprep.subr.mxu0 0.0
    %173 = vmatpush1.msra.mxu0 0.0
    %174 = vmatprep.subr.mxu0 0.0
    %175 = vmatpush1.msra.mxu0 0.0
    %176 = vmatprep.subr.mxu0 0.0
    %177 = vmatpush1.msra.mxu0 0.0
    %178 = vmatprep.subr.mxu0 0.0
    %179 = vmatpush1.msra.mxu0 0.0
    %180 = vmatprep.subr.mxu0 0.0
    %181 = vmatpush1.msra.mxu0 0.0
    %182 = vmatprep.subr.mxu0 0.0
    %183 = vmatpush1.msra.mxu0 0.0
    %184 = vmatprep.subr.mxu0 0.0
    %185 = vmatpush1.msra.mxu0 0.0
    %186 = vmatprep.subr.mxu0 0.0
    %187 = vmatpush1.msra.mxu0 0.0
    %188 = vmatprep.subr.mxu0 0.0
    %189 = vmatpush1.msra.mxu0 0.0
    %190 = vmatprep.subr.mxu0 0.0
    %191 = vmatpush1.msra.mxu0 0.0
    %192 = vmatprep.subr.mxu0 0.0
    %193 = vmatpush1.msra.mxu0 0.0
    %194 = vmatprep.mubr.f32.mxu0 0.0
    %195 = vmatmul.mubr.f32.gmra.mrb[0].mxu0 %v124
    %v196 = vpop.f32.mrb[0].mxu0
    %v197 = vadd.f32 0.0, %v196
    %v198 = vpop.f32.mrb[0].mxu0
    %199 = vdwg.mxu0
    %v200 = vld [vmem:[%s5] sm:$0xff]
    %v201 = vmul.f32 %v197, %v200
    %v202 = vadd.f32 %v201, 0.0
    %v203 = vld [vmem:[%s6] sm:$0xff]
    %v204 = vadd.f32 %v202, %v203
    %v205 = vxor.u32 %v204, 2147483648
    %v206 = vmul.f32 %v205, 1.442695
    %v207 = vpow.pop %v206
    %v208 = vadd.f32 %v207, 1.0
    %v209 = vrcp.pop %v208
    %v210 = vmul.f32 1.0, %v209
    %212 = vset.pattern.permute.xlu0 0
    %213 = vperm.xlu0 %212, %v210
    %v214 = vpop.permute.xlu0 %213
    %v216 = vmul.f32 %v29, %v214
    %v217 = vmul.f32 %v30, %v214
    %218 = vst [vmem:[#allocation3] sm:$0xff] %v216
    %219 = vst [vmem:[#allocation3 + $0x8] sm:$0xff] %v217
    // Predicated region
    $region30: #{tpu_custom_call.1} parent=1 // pred_check
      _
    $region31: #{tpu_custom_call.1} parent=1 // pred_check_branch
      %221 = sbr.rel (0) target = $region33
    $region32: #{tpu_custom_call.1} parent=1 // pred_region
      %s223 = ssub.s32 256, 256
      %224 = vsyncadd [#allocation4], %s223
      %s226 = sshll.u32 [#allocation3], 4
      %s227 = int_to_ptr.vmem [resolvable:$true] %s226
      %229 = dma.vmem_to_hbm [thread:$0]  %s227, 256, %s7, [#allocation4]
    $region33: #{tpu_custom_call.1} parent=1 // pred_fallthru
      _
    // Predicated region
    $region34: #{tpu_custom_call.1} parent=1 // pred_check
      _
    $region35: #{tpu_custom_call.1} parent=1 // pred_check_branch
      %231 = sbr.rel (0) target = $region37
    $region36: #{tpu_custom_call.1} parent=1 // pred_region
      %232 = dma.done [#allocation4], 256
    $region37: #{tpu_custom_call.1} parent=1 // pred_fallthru
      _
    %233 = vsyncpa [#allocation4], 1

</llo_original>
